<compile_context>
chip_gen: v5e
topology: v5e:2x2
jax: 0.10.0
libtpu: 0.0.40
codegen_flags: <defaults>
</compile_context>

<pallas_src>
import functools

import jax
import jax.numpy as jnp
from jax import lax
from jax.experimental import pallas as pl
from jax.experimental.pallas import tpu as pltpu


def _basic_block_kernel(x_ref, w1_ref, b1_ref, w2_ref, b2_ref, mask_ref, o_ref,
                        *, W, L):
    # x_ref   : (C, L)         L = N*H*W, batch folded onto the lane axis
    # w1_ref  : (Cpad, 9*Cin)  conv1 weight, bn1 scale folded, im2col layout,
    #                          output rows zero-padded Cp -> Cpad
    # b1_ref  : (Cpad, 1)      bn1 bias (0 on padded rows)
    # w2_ref  : (C, 9*Cpad)    conv2 weight, bn2 scale + index_add scatter folded,
    #                          lane-dense im2col layout
    # b2_ref  : (C, 1)         b2 @ scat + bn_value
    # mask_ref: (9, L)         {0,1} boundary mask per 3x3 tap (precomputed)
    # o_ref   : (C, L)
    x = x_ref[...].astype(jnp.float32)                        # (C, L)
    mask = mask_ref[...]                                      # (9, L)

    taps = tuple((oh, ow) for oh in (-1, 0, 1) for ow in (-1, 0, 1))

    def im2col(a):
        """(rows, L) -> (9*rows, L): 9 shifted+masked copies, sublane-aligned."""
        pieces = []
        for t, (oh, ow) in enumerate(taps):
            if oh == 0 and ow == 0:
                pieces.append(a)                              # center tap: no roll/mask
                continue
            s = oh * W + ow                                   # flat spatial shift
            shifted = pltpu.roll(a, (-s) % L, 1)              # lane roll (XLU slot)
            pieces.append(shifted * mask[t:t + 1, :])         # one vmul per tap
        return jnp.concatenate(pieces, axis=0)

    # ---- conv1 (3x3, pad=1, bn1 scale folded) + b1 + relu: one MXU dot -------
    p1 = im2col(x)                                            # (9*Cin, L)
    h1 = jnp.maximum(
        jnp.dot(w1_ref[...], p1, preferred_element_type=jnp.float32)
        + b1_ref[...], 0.0)                                   # (Cpad, L)

    # ---- conv2 (3x3, pad=1), bn2 scale + index_add scatter folded: one dot ---
    p2 = im2col(h1)                                           # (9*Cpad, L)
    out2 = jnp.dot(w2_ref[...], p2,
                   preferred_element_type=jnp.float32)        # (C, L)

    # ---- residual + bn_value + (b2 @ scat) + scattered conv2, then relu ------
    o_ref[...] = jnp.maximum(x + b2_ref[...] + out2, 0.0).astype(o_ref.dtype)


def basic_block_forward(x_nchw, w1, s1, b1, w2, s2, b2, bn_value, scat):
    """Eval-mode BasicBlock forward (stride=1, downsample=None).

    x_nchw: (N, C, H, W) like PyTorch.  w1: (3,3,Cin,Cp) HWIO, w2: (3,3,Cp,Cp)
    HWIO.  s*/b* are eval-mode BN folded scale/bias, bn_value: (C,), scat:
    (Cp, C) 0/1 scatter matrix implementing residual.index_add_(1, index, out).
    Returns (N, C, H, W).
    """
    N, C, H, W = x_nchw.shape
    Cin = C
    Cp = w1.shape[3]
    HW = H * W
    L = N * HW
    Cpad = max(8, -(-Cp // 8) * 8)        # pad conv1 out-channels to a sublane tile

    assert w1.shape == (3, 3, Cin, Cp) and w2.shape == (3, 3, Cp, Cp)
    assert scat.shape == (Cp, C) and bn_value.shape == (C,)
    assert L % 128 == 0, "N*H*W must be a multiple of 128 for the lane-dense layout"

    f32 = jnp.float32

    # ---------------- host-side constant folding (weights are constants) ------
    # conv1: bn1 scale folded, output channels padded Cp -> Cpad, im2col layout.
    w1_eff = (w1 * s1.reshape(1, 1, 1, Cp)).astype(f32)
    w1_eff = jnp.pad(w1_eff, ((0, 0), (0, 0), (0, 0), (0, Cpad - Cp)))
    w1_mat = jnp.transpose(w1_eff, (3, 0, 1, 2)).reshape(Cpad, 9 * Cin)
    b1_pad = jnp.pad(b1.astype(f32), (0, Cpad - Cp)).reshape(Cpad, 1)

    # conv2: bn2 scale + channel scatter folded, input channels padded Cp -> Cpad,
    # stored lane-dense as (C, 9*Cpad).
    w2_eff = jnp.einsum('hwip,p,pc->hwic', w2.astype(f32), s2.astype(f32),
                        scat.astype(f32))                     # (3,3,Cp,C)
    w2_eff = jnp.pad(w2_eff, ((0, 0), (0, 0), (0, Cpad - Cp), (0, 0)))
    w2_mat = jnp.transpose(w2_eff, (3, 0, 1, 2)).reshape(C, 9 * Cpad)
    bias_eff = (b2 @ scat + bn_value).astype(f32).reshape(C, 1)

    # 3x3 boundary masks (per tap), shared by both convs, tiled per batch element.
    pos = jnp.arange(HW)
    hh, ww = pos // W, pos % W
    mask = jnp.stack([
        ((hh + oh >= 0) & (hh + oh < H) & (ww + ow >= 0) & (ww + ow < W))
        for oh in (-1, 0, 1) for ow in (-1, 0, 1)
    ]).astype(f32)                                            # (9, HW)
    mask = jnp.tile(mask, (1, N))                             # (9, L)

    # Batch folded onto the lane axis: (N,C,H,W) -> (C, N*H*W).
    x_cl = jnp.transpose(x_nchw.reshape(N, C, HW), (1, 0, 2)).reshape(C, L)

    kernel = functools.partial(_basic_block_kernel, W=W, L=L)

    out_cl = pl.pallas_call(
        kernel,
        out_shape=jax.ShapeDtypeStruct((C, L), x_nchw.dtype),
        grid_spec=pltpu.PrefetchScalarGridSpec(
            num_scalar_prefetch=0,
            grid=(1,),
            in_specs=[
                pl.BlockSpec((C, L), lambda i: (0, 0)),
                pl.BlockSpec((Cpad, 9 * Cin), lambda i: (0, 0)),
                pl.BlockSpec((Cpad, 1), lambda i: (0, 0)),
                pl.BlockSpec((C, 9 * Cpad), lambda i: (0, 0)),
                pl.BlockSpec((C, 1), lambda i: (0, 0)),
                pl.BlockSpec((9, L), lambda i: (0, 0)),
            ],
            out_specs=pl.BlockSpec((C, L), lambda i: (0, 0)),
        ),
        compiler_params=pltpu.CompilerParams(
            dimension_semantics=("arbitrary",)),
    )(x_cl, w1_mat, b1_pad, w2_mat, bias_eff, mask)

    return jnp.transpose(out_cl.reshape(C, N, HW), (1, 0, 2)).reshape(N, C, H, W)


def _fold_bn(gamma, beta, mean, var, eps=1e-5):
    scale = gamma / jnp.sqrt(var + eps)
    bias = beta - mean * scale
    return scale, bias


def _ref_forward(x_nchw, w1, s1, b1, w2, s2, b2, bn_value, index):
    """Pure-JAX reference of BasicBlock.forward (eval-mode BN, no downsample)."""
    x = jnp.transpose(x_nchw, (0, 2, 3, 1))
    dn = ('NHWC', 'HWIO', 'NHWC')
    hp = lax.Precision.HIGHEST
    c1 = lax.conv_general_dilated(x, w1, (1, 1), 'SAME', dimension_numbers=dn,
                                  precision=hp)
    h1 = jnp.maximum(c1 * s1 + b1, 0.0)
    c2 = lax.conv_general_dilated(h1, w2, (1, 1), 'SAME', dimension_numbers=dn,
                                  precision=hp)
    out = c2 * s2 + b2
    res = x + bn_value                              # residual += bn_value
    res = res.at[..., index].add(out)               # residual.index_add_(1, index, out)
    res = jnp.maximum(res, 0.0)
    return jnp.transpose(res, (0, 3, 1, 2))


if __name__ == "__main__":
    # Small, deterministic config: inplanes = planes_before_prune = 8,
    # planes_after_prune = 4, batch = 2, spatial = 16, stride = 1, downsample = None.
    N, C, H, W = 2, 8, 16, 16
    Cp = 4
    key = jax.random.PRNGKey(0)
    ks = jax.random.split(key, 12)

    x = jax.random.normal(ks[0], (N, C, H, W), jnp.float32)

    # conv weights in HWIO layout
    w1 = jax.random.normal(ks[1], (3, 3, C, Cp), jnp.float32) * 0.1
    w2 = jax.random.normal(ks[2], (3, 3, Cp, Cp), jnp.float32) * 0.1

    # eval-mode BatchNorm parameters (deterministic, folded to scale/bias)
    g1 = jax.random.uniform(ks[3], (Cp,), jnp.float32, 0.5, 1.5)
    be1 = jax.random.normal(ks[4], (Cp,), jnp.float32) * 0.1
    m1 = jax.random.normal(ks[5], (Cp,), jnp.float32) * 0.1
    v1 = jax.random.uniform(ks[6], (Cp,), jnp.float32, 0.5, 1.5)
    g2 = jax.random.uniform(ks[7], (Cp,), jnp.float32, 0.5, 1.5)
    be2 = jax.random.normal(ks[8], (Cp,), jnp.float32) * 0.1
    m2 = jax.random.normal(ks[9], (Cp,), jnp.float32) * 0.1
    v2 = jax.random.uniform(ks[10], (Cp,), jnp.float32, 0.5, 1.5)
    s1, b1 = _fold_bn(g1, be1, m1, v1)
    s2, b2 = _fold_bn(g2, be2, m2, v2)

    # per-channel bn_value added to the residual, and the prune index
    bn_value = jax.random.normal(ks[11], (C,), jnp.float32) * 0.1
    index = jnp.array([0, 2, 5, 7], dtype=jnp.int32)          # len == Cp
    scat = jnp.zeros((Cp, C), jnp.float32).at[jnp.arange(Cp), index].set(1.0)

    y = basic_block_forward(x, w1, s1, b1, w2, s2, b2, bn_value, scat)
    y = jax.block_until_ready(y)

    y_ref = _ref_forward(x, w1, s1, b1, w2, s2, b2, bn_value, index)
    max_diff = float(jnp.max(jnp.abs(y - y_ref)))
    assert y.shape == (N, C, H, W), y.shape
    # All-f32 path; typical observed diff is ~1e-6, tolerance tightened per review.
    assert max_diff < 2e-3, f"max_diff={max_diff}"

    print("KERNEL_OK")
</pallas_src>

<mosaic_0001>
module attributes {stable_mosaic.version = 11 : i64} {
  func.func @_basic_block_kernel(%arg0: i32, %arg1: memref<8x512xf32, #tpu.memory_space<vmem>>, %arg2: memref<8x72xf32, #tpu.memory_space<vmem>>, %arg3: memref<8x1xf32, #tpu.memory_space<vmem>>, %arg4: memref<8x72xf32, #tpu.memory_space<vmem>>, %arg5: memref<8x1xf32, #tpu.memory_space<vmem>>, %arg6: memref<9x512xf32, #tpu.memory_space<vmem>>, %arg7: memref<8x512xf32, #tpu.memory_space<vmem>>) attributes {dimension_semantics = [#tpu.dimension_semantics<arbitrary>], iteration_bounds = array<i64: 1>, scalar_prefetch = 0 : i64, scratch_operands = 0 : i64, tpu.core_type = #tpu.core_type<tc>, window_params = [{pipeline_mode = #tpu.pipeline_mode<synchronous>, transform_indices = @transform_0, window_bounds = array<i64: 8, 512>}, {pipeline_mode = #tpu.pipeline_mode<synchronous>, transform_indices = @transform_1, window_bounds = array<i64: 8, 72>}, {pipeline_mode = #tpu.pipeline_mode<synchronous>, transform_indices = @transform_2, window_bounds = array<i64: 8, 1>}, {pipeline_mode = #tpu.pipeline_mode<synchronous>, transform_indices = @transform_3, window_bounds = array<i64: 8, 72>}, {pipeline_mode = #tpu.pipeline_mode<synchronous>, transform_indices = @transform_4, window_bounds = array<i64: 8, 1>}, {pipeline_mode = #tpu.pipeline_mode<synchronous>, transform_indices = @transform_5, window_bounds = array<i64: 9, 512>}, {pipeline_mode = #tpu.pipeline_mode<synchronous>, transform_indices = @transform_6, window_bounds = array<i64: 8, 512>}]} {
    %c0 = arith.constant 0 : index
    %c0_0 = arith.constant 0 : index
    %0 = vector.load %arg1[%c0, %c0_0] : memref<8x512xf32, #tpu.memory_space<vmem>>, vector<8x512xf32>
    %c0_1 = arith.constant 0 : index
    %c0_2 = arith.constant 0 : index
    %1 = vector.load %arg6[%c0_1, %c0_2] : memref<9x512xf32, #tpu.memory_space<vmem>>, vector<9x512xf32>
    %c17_i32 = arith.constant 17 : i32
    %2 = tpu.dynamic_rotate %0 by %c17_i32 dim 1 : vector<8x512xf32>, i32 -> vector<8x512xf32>
    %3 = vector.extract_strided_slice %1 {offsets = [0, 0], sizes = [1, 512], strides = [1, 1]} : vector<9x512xf32> to vector<1x512xf32>
    %4 = vector.broadcast %3 : vector<1x512xf32> to vector<8x512xf32>
    %5 = arith.mulf %2, %4 : vector<8x512xf32>
    %c16_i32 = arith.constant 16 : i32
    %6 = tpu.dynamic_rotate %0 by %c16_i32 dim 1 : vector<8x512xf32>, i32 -> vector<8x512xf32>
    %7 = vector.extract_strided_slice %1 {offsets = [1, 0], sizes = [1, 512], strides = [1, 1]} : vector<9x512xf32> to vector<1x512xf32>
    %8 = vector.broadcast %7 : vector<1x512xf32> to vector<8x512xf32>
    %9 = arith.mulf %6, %8 : vector<8x512xf32>
    %c15_i32 = arith.constant 15 : i32
    %10 = tpu.dynamic_rotate %0 by %c15_i32 dim 1 : vector<8x512xf32>, i32 -> vector<8x512xf32>
    %11 = vector.extract_strided_slice %1 {offsets = [2, 0], sizes = [1, 512], strides = [1, 1]} : vector<9x512xf32> to vector<1x512xf32>
    %12 = vector.broadcast %11 : vector<1x512xf32> to vector<8x512xf32>
    %13 = arith.mulf %10, %12 : vector<8x512xf32>
    %c1_i32 = arith.constant 1 : i32
    %14 = tpu.dynamic_rotate %0 by %c1_i32 dim 1 : vector<8x512xf32>, i32 -> vector<8x512xf32>
    %15 = vector.extract_strided_slice %1 {offsets = [3, 0], sizes = [1, 512], strides = [1, 1]} : vector<9x512xf32> to vector<1x512xf32>
    %16 = vector.broadcast %15 : vector<1x512xf32> to vector<8x512xf32>
    %17 = arith.mulf %14, %16 : vector<8x512xf32>
    %c511_i32 = arith.constant 511 : i32
    %18 = tpu.dynamic_rotate %0 by %c511_i32 dim 1 : vector<8x512xf32>, i32 -> vector<8x512xf32>
    %19 = vector.extract_strided_slice %1 {offsets = [5, 0], sizes = [1, 512], strides = [1, 1]} : vector<9x512xf32> to vector<1x512xf32>
    %20 = vector.broadcast %19 : vector<1x512xf32> to vector<8x512xf32>
    %21 = arith.mulf %18, %20 : vector<8x512xf32>
    %c497_i32 = arith.constant 497 : i32
    %22 = tpu.dynamic_rotate %0 by %c497_i32 dim 1 : vector<8x512xf32>, i32 -> vector<8x512xf32>
    %23 = vector.extract_strided_slice %1 {offsets = [6, 0], sizes = [1, 512], strides = [1, 1]} : vector<9x512xf32> to vector<1x512xf32>
    %24 = vector.broadcast %23 : vector<1x512xf32> to vector<8x512xf32>
    %25 = arith.mulf %22, %24 : vector<8x512xf32>
    %c496_i32 = arith.constant 496 : i32
    %26 = tpu.dynamic_rotate %0 by %c496_i32 dim 1 : vector<8x512xf32>, i32 -> vector<8x512xf32>
    %27 = vector.extract_strided_slice %1 {offsets = [7, 0], sizes = [1, 512], strides = [1, 1]} : vector<9x512xf32> to vector<1x512xf32>
    %28 = vector.broadcast %27 : vector<1x512xf32> to vector<8x512xf32>
    %29 = arith.mulf %26, %28 : vector<8x512xf32>
    %c495_i32 = arith.constant 495 : i32
    %30 = tpu.dynamic_rotate %0 by %c495_i32 dim 1 : vector<8x512xf32>, i32 -> vector<8x512xf32>
    %31 = vector.extract_strided_slice %1 {offsets = [8, 0], sizes = [1, 512], strides = [1, 1]} : vector<9x512xf32> to vector<1x512xf32>
    %32 = vector.broadcast %31 : vector<1x512xf32> to vector<8x512xf32>
    %33 = arith.mulf %30, %32 : vector<8x512xf32>
    %34 = tpu.concatenate %5, %9, %13, %17, %0, %21, %25, %29, %33 in 0 : vector<8x512xf32>, vector<8x512xf32>, vector<8x512xf32>, vector<8x512xf32>, vector<8x512xf32>, vector<8x512xf32>, vector<8x512xf32>, vector<8x512xf32>, vector<8x512xf32> -> vector<72x512xf32>
    %c0_3 = arith.constant 0 : index
    %c0_4 = arith.constant 0 : index
    %35 = vector.load %arg2[%c0_3, %c0_4] : memref<8x72xf32, #tpu.memory_space<vmem>>, vector<8x72xf32>
    %cst = arith.constant dense<0.000000e+00> : vector<8x512xf32>
    %36 = tpu.matmul %35, %34, %cst {dimension_numbers = #tpu.dot_dimension_numbers<[1], [0], [0], [1], [0, 0, 1, 1], [], []>} : vector<8x72xf32>, vector<72x512xf32>, vector<8x512xf32> -> vector<8x512xf32>
    %c0_5 = arith.constant 0 : index
    %c0_6 = arith.constant 0 : index
    %37 = vector.load %arg3[%c0_5, %c0_6] : memref<8x1xf32, #tpu.memory_space<vmem>>, vector<8x1xf32>
    %38 = vector.broadcast %37 : vector<8x1xf32> to vector<8x512xf32>
    %39 = arith.addf %36, %38 : vector<8x512xf32>
    %cst_7 = arith.constant 0.000000e+00 : f32
    %40 = vector.broadcast %cst_7 : f32 to vector<8x512xf32>
    %41 = arith.maximumf %39, %40 : vector<8x512xf32>
    %c17_i32_8 = arith.constant 17 : i32
    %42 = tpu.dynamic_rotate %41 by %c17_i32_8 dim 1 : vector<8x512xf32>, i32 -> vector<8x512xf32>
    %43 = vector.extract_strided_slice %1 {offsets = [0, 0], sizes = [1, 512], strides = [1, 1]} : vector<9x512xf32> to vector<1x512xf32>
    %44 = vector.broadcast %43 : vector<1x512xf32> to vector<8x512xf32>
    %45 = arith.mulf %42, %44 : vector<8x512xf32>
    %c16_i32_9 = arith.constant 16 : i32
    %46 = tpu.dynamic_rotate %41 by %c16_i32_9 dim 1 : vector<8x512xf32>, i32 -> vector<8x512xf32>
    %47 = vector.extract_strided_slice %1 {offsets = [1, 0], sizes = [1, 512], strides = [1, 1]} : vector<9x512xf32> to vector<1x512xf32>
    %48 = vector.broadcast %47 : vector<1x512xf32> to vector<8x512xf32>
    %49 = arith.mulf %46, %48 : vector<8x512xf32>
    %c15_i32_10 = arith.constant 15 : i32
    %50 = tpu.dynamic_rotate %41 by %c15_i32_10 dim 1 : vector<8x512xf32>, i32 -> vector<8x512xf32>
    %51 = vector.extract_strided_slice %1 {offsets = [2, 0], sizes = [1, 512], strides = [1, 1]} : vector<9x512xf32> to vector<1x512xf32>
    %52 = vector.broadcast %51 : vector<1x512xf32> to vector<8x512xf32>
    %53 = arith.mulf %50, %52 : vector<8x512xf32>
    %c1_i32_11 = arith.constant 1 : i32
    %54 = tpu.dynamic_rotate %41 by %c1_i32_11 dim 1 : vector<8x512xf32>, i32 -> vector<8x512xf32>
    %55 = vector.extract_strided_slice %1 {offsets = [3, 0], sizes = [1, 512], strides = [1, 1]} : vector<9x512xf32> to vector<1x512xf32>
    %56 = vector.broadcast %55 : vector<1x512xf32> to vector<8x512xf32>
    %57 = arith.mulf %54, %56 : vector<8x512xf32>
    %c511_i32_12 = arith.constant 511 : i32
    %58 = tpu.dynamic_rotate %41 by %c511_i32_12 dim 1 : vector<8x512xf32>, i32 -> vector<8x512xf32>
    %59 = vector.extract_strided_slice %1 {offsets = [5, 0], sizes = [1, 512], strides = [1, 1]} : vector<9x512xf32> to vector<1x512xf32>
    %60 = vector.broadcast %59 : vector<1x512xf32> to vector<8x512xf32>
    %61 = arith.mulf %58, %60 : vector<8x512xf32>
    %c497_i32_13 = arith.constant 497 : i32
    %62 = tpu.dynamic_rotate %41 by %c497_i32_13 dim 1 : vector<8x512xf32>, i32 -> vector<8x512xf32>
    %63 = vector.extract_strided_slice %1 {offsets = [6, 0], sizes = [1, 512], strides = [1, 1]} : vector<9x512xf32> to vector<1x512xf32>
    %64 = vector.broadcast %63 : vector<1x512xf32> to vector<8x512xf32>
    %65 = arith.mulf %62, %64 : vector<8x512xf32>
    %c496_i32_14 = arith.constant 496 : i32
    %66 = tpu.dynamic_rotate %41 by %c496_i32_14 dim 1 : vector<8x512xf32>, i32 -> vector<8x512xf32>
    %67 = vector.extract_strided_slice %1 {offsets = [7, 0], sizes = [1, 512], strides = [1, 1]} : vector<9x512xf32> to vector<1x512xf32>
    %68 = vector.broadcast %67 : vector<1x512xf32> to vector<8x512xf32>
    %69 = arith.mulf %66, %68 : vector<8x512xf32>
    %c495_i32_15 = arith.constant 495 : i32
    %70 = tpu.dynamic_rotate %41 by %c495_i32_15 dim 1 : vector<8x512xf32>, i32 -> vector<8x512xf32>
    %71 = vector.extract_strided_slice %1 {offsets = [8, 0], sizes = [1, 512], strides = [1, 1]} : vector<9x512xf32> to vector<1x512xf32>
    %72 = vector.broadcast %71 : vector<1x512xf32> to vector<8x512xf32>
    %73 = arith.mulf %70, %72 : vector<8x512xf32>
    %74 = tpu.concatenate %45, %49, %53, %57, %41, %61, %65, %69, %73 in 0 : vector<8x512xf32>, vector<8x512xf32>, vector<8x512xf32>, vector<8x512xf32>, vector<8x512xf32>, vector<8x512xf32>, vector<8x512xf32>, vector<8x512xf32>, vector<8x512xf32> -> vector<72x512xf32>
    %c0_16 = arith.constant 0 : index
    %c0_17 = arith.constant 0 : index
    %75 = vector.load %arg4[%c0_16, %c0_17] : memref<8x72xf32, #tpu.memory_space<vmem>>, vector<8x72xf32>
    %cst_18 = arith.constant dense<0.000000e+00> : vector<8x512xf32>
    %76 = tpu.matmul %75, %74, %cst_18 {dimension_numbers = #tpu.dot_dimension_numbers<[1], [0], [0], [1], [0, 0, 1, 1], [], []>} : vector<8x72xf32>, vector<72x512xf32>, vector<8x512xf32> -> vector<8x512xf32>
    %c0_19 = arith.constant 0 : index
    %c0_20 = arith.constant 0 : index
    %77 = vector.load %arg5[%c0_19, %c0_20] : memref<8x1xf32, #tpu.memory_space<vmem>>, vector<8x1xf32>
    %78 = vector.broadcast %77 : vector<8x1xf32> to vector<8x512xf32>
    %79 = arith.addf %0, %78 : vector<8x512xf32>
    %80 = arith.addf %79, %76 : vector<8x512xf32>
    %cst_21 = arith.constant 0.000000e+00 : f32
    %81 = vector.broadcast %cst_21 : f32 to vector<8x512xf32>
    %82 = arith.maximumf %80, %81 : vector<8x512xf32>
    %c0_22 = arith.constant 0 : index
    %c0_23 = arith.constant 0 : index
    %83 = vector.load %arg7[%c0_22, %c0_23] : memref<8x512xf32, #tpu.memory_space<vmem>>, vector<8x512xf32>
    tpu.vector_store %arg7[%c0_22, %c0_23], %82 {strides = array<i32>} : memref<8x512xf32, #tpu.memory_space<vmem>>, vector<8x512xf32>,
    return
  }
  func.func @transform_0(%arg0: i32) -> (i32, i32) {
    %c0_i32 = arith.constant 0 : i32
    %c0_i32_0 = arith.constant 0 : i32
    %c0_i32_1 = arith.constant 0 : i32
    return %c0_i32, %c0_i32_0 : i32, i32
  }
  func.func @transform_1(%arg0: i32) -> (i32, i32) {
    %c0_i32 = arith.constant 0 : i32
    %c0_i32_0 = arith.constant 0 : i32
    %c0_i32_1 = arith.constant 0 : i32
    return %c0_i32, %c0_i32_0 : i32, i32
  }
  func.func @transform_2(%arg0: i32) -> (i32, i32) {
    %c0_i32 = arith.constant 0 : i32
    %c0_i32_0 = arith.constant 0 : i32
    %c0_i32_1 = arith.constant 0 : i32
    return %c0_i32, %c0_i32_0 : i32, i32
  }
  func.func @transform_3(%arg0: i32) -> (i32, i32) {
    %c0_i32 = arith.constant 0 : i32
    %c0_i32_0 = arith.constant 0 : i32
    %c0_i32_1 = arith.constant 0 : i32
    return %c0_i32, %c0_i32_0 : i32, i32
  }
  func.func @transform_4(%arg0: i32) -> (i32, i32) {
    %c0_i32 = arith.constant 0 : i32
    %c0_i32_0 = arith.constant 0 : i32
    %c0_i32_1 = arith.constant 0 : i32
    return %c0_i32, %c0_i32_0 : i32, i32
  }
  func.func @transform_5(%arg0: i32) -> (i32, i32) {
    %c0_i32 = arith.constant 0 : i32
    %c0_i32_0 = arith.constant 0 : i32
    %c0_i32_1 = arith.constant 0 : i32
    return %c0_i32, %c0_i32_0 : i32, i32
  }
  func.func @transform_6(%arg0: i32) -> (i32, i32) {
    %c0_i32 = arith.constant 0 : i32
    %c0_i32_0 = arith.constant 0 : i32
    %c0_i32_1 = arith.constant 0 : i32
    return %c0_i32, %c0_i32_0 : i32, i32
  }
}

</mosaic_0001>

<llo_original>
// kernel: tpu_custom_call.1
$region0: #{tpu_custom_call.1}
  #allocation0 [shape = 'u32[]', space=smem, size = 0x4, offset = 0x4, fixed_abs, tag = 'smem constant byte address 0x4 - core index']
  #allocation1 [shape = 'u32[72,128]{1,0:T(1,128)}', space=vmem, size = 0x9000, scoped, tag = 'internal scratch']
  %s0 = inlined_call_operand.hbm [shape: f32[8,512], index: 0, kind: input, shape index: {}]
  %s1 = inlined_call_operand.vmem [shape: f32[8,72], index: 1, kind: input, shape index: {}]
  %s2 = inlined_call_operand.vmem [shape: f32[8,1], index: 2, kind: input, shape index: {}]
  %s3 = inlined_call_operand.vmem [shape: f32[8,72], index: 3, kind: input, shape index: {}]
  %s4 = inlined_call_operand.vmem [shape: f32[8,1], index: 4, kind: input, shape index: {}]
  %s5 = inlined_call_operand.hbm [shape: f32[9,512], index: 5, kind: input, shape index: {}]
  %s6 = inlined_call_operand.hbm [shape: f32[8,512], index: 6, kind: output, shape index: {}]
  %s7 = sld [smem:[#allocation0]]
  $region42: #{tpu_custom_call.1} parent=0
    _
  %s9 = ssub.s32 1, %s7
  %s10 = scalar_select 0, %s9, %s7
  $region1: #{tpu_custom_call.1} parent=0
    #allocation2 [shape = 'u8[16384]{0}', space=vmem, size = 0x4000, scoped, tag = 'input window, operand 0, single buffered']
    #allocation3 [shape = 's32[1]{0}', space=sflag, size = 0x4, scoped, tag = 'scoped memory for tpu_custom_call.1']
    #allocation4 [shape = 's32[1]{0}', space=sflag, size = 0x4, scoped, tag = 'scoped memory for tpu_custom_call.1']
    #allocation5 [shape = 'u8[32768]{0}', space=vmem, size = 0x8000, scoped, tag = 'input window, operand 5, single buffered']
    #allocation6 [shape = 's32[1]{0}', space=sflag, size = 0x4, scoped, tag = 'scoped memory for tpu_custom_call.1']
    #allocation7 [shape = 'u8[16384]{0}', space=vmem, size = 0x4000, scoped, tag = 'output window, operand 0, single buffered']
    %11 = vsyncpa [#allocation3], 0
    %12 = vsyncpa [#allocation6], 0
    %13 = vsyncpa [#allocation4], 0
    // Predicated region
    $region2: #{tpu_custom_call.1} parent=1 // pred_check
      _
    $region3: #{tpu_custom_call.1} parent=1 // pred_check_branch
      %15 = sbr.rel (0) target = $region5
    $region4: #{tpu_custom_call.1} parent=1 // pred_region
      %17 = vsyncadd [#allocation3], 0
      %s19 = sshll.u32 %s0, 4
      %s20 = int_to_ptr.hbm [resolvable:$true] %s19
      %s21 = sshll.u32 [#allocation2], 4
      %s22 = int_to_ptr.vmem [resolvable:$true] %s21
      %24 = dma.hbm_to_vmem [thread:$0]  %s20, 512, %s22, [#allocation3]
    $region5: #{tpu_custom_call.1} parent=1 // pred_fallthru
      _
    // Predicated region
    $region6: #{tpu_custom_call.1} parent=1 // pred_check
      _
    $region7: #{tpu_custom_call.1} parent=1 // pred_check_branch
      %26 = sbr.rel (0) target = $region9
    $region8: #{tpu_custom_call.1} parent=1 // pred_region
      _
    $region9: #{tpu_custom_call.1} parent=1 // pred_fallthru
      _
    // Predicated region
    $region10: #{tpu_custom_call.1} parent=1 // pred_check
      _
    $region11: #{tpu_custom_call.1} parent=1 // pred_check_branch
      %28 = sbr.rel (0) target = $region13
    $region12: #{tpu_custom_call.1} parent=1 // pred_region
      _
    $region13: #{tpu_custom_call.1} parent=1 // pred_fallthru
      _
    // Predicated region
    $region14: #{tpu_custom_call.1} parent=1 // pred_check
      _
    $region15: #{tpu_custom_call.1} parent=1 // pred_check_branch
      %30 = sbr.rel (0) target = $region17
    $region16: #{tpu_custom_call.1} parent=1 // pred_region
      _
    $region17: #{tpu_custom_call.1} parent=1 // pred_fallthru
      _
    // Predicated region
    $region18: #{tpu_custom_call.1} parent=1 // pred_check
      _
    $region19: #{tpu_custom_call.1} parent=1 // pred_check_branch
      %32 = sbr.rel (0) target = $region21
    $region20: #{tpu_custom_call.1} parent=1 // pred_region
      _
    $region21: #{tpu_custom_call.1} parent=1 // pred_fallthru
      _
    // Predicated region
    $region22: #{tpu_custom_call.1} parent=1 // pred_check
      _
    $region23: #{tpu_custom_call.1} parent=1 // pred_check_branch
      %34 = sbr.rel (0) target = $region25
    $region24: #{tpu_custom_call.1} parent=1 // pred_region
      %36 = vsyncadd [#allocation6], 0
      %s37 = sshll.u32 %s5, 4
      %s38 = int_to_ptr.hbm [resolvable:$true] %s37
      %s39 = sshll.u32 [#allocation5], 4
      %s40 = int_to_ptr.vmem [resolvable:$true] %s39
      %45 = dma.hbm_to_vmem [thread:$0]  %s38, 1024, %s40, [#allocation6], 512, 512, 32
    $region25: #{tpu_custom_call.1} parent=1 // pred_fallthru
      _
    // Predicated region
    $region26: #{tpu_custom_call.1} parent=1 // pred_check
      _
    $region27: #{tpu_custom_call.1} parent=1 // pred_check_branch
      %47 = sbr.rel (0) target = $region29
    $region28: #{tpu_custom_call.1} parent=1 // pred_region
      %49 = dma.done [#allocation3], 512
    $region29: #{tpu_custom_call.1} parent=1 // pred_fallthru
      _
    // Predicated region
    $region30: #{tpu_custom_call.1} parent=1 // pred_check
      _
    $region31: #{tpu_custom_call.1} parent=1 // pred_check_branch
      %51 = sbr.rel (0) target = $region33
    $region32: #{tpu_custom_call.1} parent=1 // pred_region
      %53 = dma.done [#allocation6], 1024
    $region33: #{tpu_custom_call.1} parent=1 // pred_fallthru
      _
    %v54 = vld [vmem:[#allocation2] sm:$0xff]
    %v55 = vld [vmem:[#allocation2 + $0x8] sm:$0xff]
    %v56 = vld [vmem:[#allocation2 + $0x10] sm:$0xff]
    %v57 = vld [vmem:[#allocation2 + $0x18] sm:$0xff]
    %v58 = vld [vmem:[#allocation5] sm:$0xff]
    %v59 = vld [vmem:[#allocation5 + $0x8] sm:$0xff]
    %v60 = vld [vmem:[#allocation5 + $0x10] sm:$0xff]
    %v61 = vld [vmem:[#allocation5 + $0x18] sm:$0xff]
    %v62 = vld [vmem:[#allocation5 + $0x20] sm:$0x1]
    %v63 = vld [vmem:[#allocation5 + $0x28] sm:$0x1]
    %v64 = vld [vmem:[#allocation5 + $0x30] sm:$0x1]
    %v65 = vld [vmem:[#allocation5 + $0x38] sm:$0x1]
    %66 = vrot.lane.b32.xlu0 %v54, 17
    %v67 = vpop.permute.xlu0 %66
    %68 = vrot.lane.b32.xlu0 %v55, 17
    %v69 = vpop.permute.xlu0 %68
    %70 = vrot.lane.b32.xlu0 %v56, 17
    %v71 = vpop.permute.xlu0 %70
    %72 = vrot.lane.b32.xlu0 %v57, 17
    %v73 = vpop.permute.xlu0 %72
    %v74 = vlaneseq
    %v75 = vand.u32 %v74, 127
    %vm76 = vcmp.lt.s32.totalorder %v75, 17
    %v77 = vsel %vm76, %v71, %v73
    %v78 = vsel %vm76, %v69, %v71
    %v79 = vsel %vm76, %v67, %v69
    %v80 = vsel %vm76, %v73, %v67
    %v81 = vperm.slane %v58, 0
    %v82 = vperm.slane %v59, 0
    %v83 = vperm.slane %v60, 0
    %v84 = vperm.slane %v61, 0
    %v85 = vmul.f32 %v80, %v81
    %v86 = vmul.f32 %v79, %v82
    %v87 = vmul.f32 %v78, %v83
    %v88 = vmul.f32 %v77, %v84
    %89 = vrot.lane.b32.xlu0 %v54, 16
    %v90 = vpop.permute.xlu0 %89
    %91 = vrot.lane.b32.xlu0 %v55, 16
    %v92 = vpop.permute.xlu0 %91
    %93 = vrot.lane.b32.xlu0 %v56, 16
    %v94 = vpop.permute.xlu0 %93
    %95 = vrot.lane.b32.xlu0 %v57, 16
    %v96 = vpop.permute.xlu0 %95
    %vm97 = vcmp.lt.s32.totalorder %v75, 16
    %v98 = vsel %vm97, %v94, %v96
    %v99 = vsel %vm97, %v92, %v94
    %v100 = vsel %vm97, %v90, %v92
    %v101 = vsel %vm97, %v96, %v90
    %v102 = vperm.slane %v58, 1
    %v103 = vperm.slane %v59, 1
    %v104 = vperm.slane %v60, 1
    %v105 = vperm.slane %v61, 1
    %v106 = vmul.f32 %v101, %v102
    %v107 = vmul.f32 %v100, %v103
    %v108 = vmul.f32 %v99, %v104
    %v109 = vmul.f32 %v98, %v105
    %110 = vrot.lane.b32.xlu0 %v54, 15
    %v111 = vpop.permute.xlu0 %110
    %112 = vrot.lane.b32.xlu0 %v55, 15
    %v113 = vpop.permute.xlu0 %112
    %114 = vrot.lane.b32.xlu0 %v56, 15
    %v115 = vpop.permute.xlu0 %114
    %116 = vrot.lane.b32.xlu0 %v57, 15
    %v117 = vpop.permute.xlu0 %116
    %vm118 = vcmp.lt.s32.totalorder %v75, 15
    %v119 = vsel %vm118, %v115, %v117
    %v120 = vsel %vm118, %v113, %v115
    %v121 = vsel %vm118, %v111, %v113
    %v122 = vsel %vm118, %v117, %v111
    %v123 = vperm.slane %v58, 2
    %v124 = vperm.slane %v59, 2
    %v125 = vperm.slane %v60, 2
    %v126 = vperm.slane %v61, 2
    %v127 = vmul.f32 %v122, %v123
    %v128 = vmul.f32 %v121, %v124
    %v129 = vmul.f32 %v120, %v125
    %v130 = vmul.f32 %v119, %v126
    %131 = vrot.lane.b32.xlu0 %v54, 1
    %v132 = vpop.permute.xlu0 %131
    %133 = vrot.lane.b32.xlu0 %v55, 1
    %v134 = vpop.permute.xlu0 %133
    %135 = vrot.lane.b32.xlu0 %v56, 1
    %v136 = vpop.permute.xlu0 %135
    %137 = vrot.lane.b32.xlu0 %v57, 1
    %v138 = vpop.permute.xlu0 %137
    %vm139 = vcmp.lt.s32.totalorder %v75, 1
    %v140 = vsel %vm139, %v136, %v138
    %v141 = vsel %vm139, %v134, %v136
    %v142 = vsel %vm139, %v132, %v134
    %v143 = vsel %vm139, %v138, %v132
    %v144 = vperm.slane %v58, 3
    %v145 = vperm.slane %v59, 3
    %v146 = vperm.slane %v60, 3
    %v147 = vperm.slane %v61, 3
    %v148 = vmul.f32 %v143, %v144
    %v149 = vmul.f32 %v142, %v145
    %v150 = vmul.f32 %v141, %v146
    %v151 = vmul.f32 %v140, %v147
    %152 = vrot.lane.b32.xlu0 %v54, 127
    %v153 = vpop.permute.xlu0 %152
    %154 = vrot.lane.b32.xlu0 %v55, 127
    %v155 = vpop.permute.xlu0 %154
    %156 = vrot.lane.b32.xlu0 %v56, 127
    %v157 = vpop.permute.xlu0 %156
    %158 = vrot.lane.b32.xlu0 %v57, 127
    %v159 = vpop.permute.xlu0 %158
    %vm160 = vcmp.lt.s32.totalorder %v75, 127
    %v161 = vsel %vm160, %v157, %v159
    %v162 = vsel %vm160, %v155, %v157
    %v163 = vsel %vm160, %v153, %v155
    %v164 = vsel %vm160, %v159, %v153
    %v165 = vperm.slane %v58, 5
    %v166 = vperm.slane %v59, 5
    %v167 = vperm.slane %v60, 5
    %v168 = vperm.slane %v61, 5
    %v169 = vmul.f32 %v163, %v165
    %v170 = vmul.f32 %v162, %v166
    %v171 = vmul.f32 %v161, %v167
    %v172 = vmul.f32 %v164, %v168
    %173 = vrot.lane.b32.xlu0 %v54, 113
    %v174 = vpop.permute.xlu0 %173
    %175 = vrot.lane.b32.xlu0 %v55, 113
    %v176 = vpop.permute.xlu0 %175
    %177 = vrot.lane.b32.xlu0 %v56, 113
    %v178 = vpop.permute.xlu0 %177
    %179 = vrot.lane.b32.xlu0 %v57, 113
    %v180 = vpop.permute.xlu0 %179
    %vm181 = vcmp.lt.s32.totalorder %v75, 113
    %v182 = vsel %vm181, %v178, %v180
    %v183 = vsel %vm181, %v176, %v178
    %v184 = vsel %vm181, %v174, %v176
    %v185 = vsel %vm181, %v180, %v174
    %v186 = vperm.slane %v58, 6
    %v187 = vperm.slane %v59, 6
    %v188 = vperm.slane %v60, 6
    %v189 = vperm.slane %v61, 6
    %v190 = vmul.f32 %v184, %v186
    %v191 = vmul.f32 %v183, %v187
    %v192 = vmul.f32 %v182, %v188
    %v193 = vmul.f32 %v185, %v189
    %194 = vrot.lane.b32.xlu0 %v54, 112
    %v195 = vpop.permute.xlu0 %194
    %196 = vrot.lane.b32.xlu0 %v55, 112
    %v197 = vpop.permute.xlu0 %196
    %198 = vrot.lane.b32.xlu0 %v56, 112
    %v199 = vpop.permute.xlu0 %198
    %200 = vrot.lane.b32.xlu0 %v57, 112
    %v201 = vpop.permute.xlu0 %200
    %vm202 = vcmp.lt.s32.totalorder %v75, 112
    %v203 = vsel %vm202, %v199, %v201
    %v204 = vsel %vm202, %v197, %v199
    %v205 = vsel %vm202, %v195, %v197
    %v206 = vsel %vm202, %v201, %v195
    %v207 = vperm.slane %v58, 7
    %v208 = vperm.slane %v59, 7
    %v209 = vperm.slane %v60, 7
    %v210 = vperm.slane %v61, 7
    %v211 = vmul.f32 %v205, %v207
    %v212 = vmul.f32 %v204, %v208
    %v213 = vmul.f32 %v203, %v209
    %v214 = vmul.f32 %v206, %v210
    %215 = vrot.lane.b32.xlu0 %v54, 111
    %v216 = vpop.permute.xlu0 %215
    %217 = vrot.lane.b32.xlu0 %v55, 111
    %v218 = vpop.permute.xlu0 %217
    %219 = vrot.lane.b32.xlu0 %v56, 111
    %v220 = vpop.permute.xlu0 %219
    %221 = vrot.lane.b32.xlu0 %v57, 111
    %v222 = vpop.permute.xlu0 %221
    %vm223 = vcmp.lt.s32.totalorder %v75, 111
    %v224 = vsel %vm223, %v220, %v222
    %v225 = vsel %vm223, %v218, %v220
    %v226 = vsel %vm223, %v216, %v218
    %v227 = vsel %vm223, %v222, %v216
    %v228 = vperm.slane %v62, 0
    %v229 = vperm.slane %v63, 0
    %v230 = vperm.slane %v64, 0
    %v231 = vperm.slane %v65, 0
    %v232 = vmul.f32 %v226, %v228
    %v233 = vmul.f32 %v225, %v229
    %v234 = vmul.f32 %v224, %v230
    %v235 = vmul.f32 %v227, %v231
    %v236 = vld [vmem:[%s1] sm:$0xff]
    %v237 = vld [vmem:[%s2] sm:$0xff]
    %239 = vset.pattern.permute.xlu0 0
    %240 = vperm.xlu0 %239, %v237
    %v241 = vpop.permute.xlu0 %240
    %vm243 = vcmask 588800
    %v245 = vsel %vm243, %v236, 0
    %247 = vmatpush.msra.mxu0 0.0
    %248 = vmatpush.msra.mxu0 0.0
    %249 = vmatpush.msra.mxu0 0.0
    %250 = vmatpush.msra.mxu0 0.0
    %251 = vmatpush.msra.mxu0 0.0
    %252 = vmatpush.msra.mxu0 0.0
    %253 = vmatpush.msra.mxu0 0.0
    %254 = vmatpush.msra.mxu0 %v232
    %255 = vmatpush.msra.mxu0 %v211
    %256 = vmatpush.msra.mxu0 %v190
    %257 = vmatpush.msra.mxu0 %v169
    %258 = vmatpush.msra.mxu0 %v54
    %259 = vmatpush.msra.mxu0 %v148
    %260 = vmatpush.msra.mxu0 %v127
    %261 = vmatpush.msra.mxu0 %v106
    %262 = vmatpush.msra.mxu0 %v85
    %263 = vmatmul.f32.gmra.mxu0 %v245
    %v264 = vpop.f32.mrf.mxu0
    %v265 = vadd.f32 %v241, %v264
    %266 = vdwg.mxu0
    %267 = vmatpush.msra.mxu0 0.0
    %268 = vmatpush.msra.mxu0 0.0
    %269 = vmatpush.msra.mxu0 0.0
    %270 = vmatpush.msra.mxu0 0.0
    %271 = vmatpush.msra.mxu0 0.0
    %272 = vmatpush.msra.mxu0 0.0
    %273 = vmatpush.msra.mxu0 0.0
    %274 = vmatpush.msra.mxu0 %v233
    %275 = vmatpush.msra.mxu0 %v212
    %276 = vmatpush.msra.mxu0 %v191
    %277 = vmatpush.msra.mxu0 %v170
    %278 = vmatpush.msra.mxu0 %v55
    %279 = vmatpush.msra.mxu0 %v149
    %280 = vmatpush.msra.mxu0 %v128
    %281 = vmatpush.msra.mxu0 %v107
    %282 = vmatpush.msra.mxu0 %v86
    %283 = vmatmul.f32.gmra.mxu0 %v245
    %v284 = vpop.f32.mrf.mxu0
    %v285 = vadd.f32 %v241, %v284
    %286 = vdwg.mxu0
    %287 = vmatpush.msra.mxu0 0.0
    %288 = vmatpush.msra.mxu0 0.0
    %289 = vmatpush.msra.mxu0 0.0
    %290 = vmatpush.msra.mxu0 0.0
    %291 = vmatpush.msra.mxu0 0.0
    %292 = vmatpush.msra.mxu0 0.0
    %293 = vmatpush.msra.mxu0 0.0
    %294 = vmatpush.msra.mxu0 %v234
    %295 = vmatpush.msra.mxu0 %v213
    %296 = vmatpush.msra.mxu0 %v192
    %297 = vmatpush.msra.mxu0 %v171
    %298 = vmatpush.msra.mxu0 %v56
    %299 = vmatpush.msra.mxu0 %v150
    %300 = vmatpush.msra.mxu0 %v129
    %301 = vmatpush.msra.mxu0 %v108
    %302 = vmatpush.msra.mxu0 %v87
    %303 = vmatmul.f32.gmra.mxu0 %v245
    %v304 = vpop.f32.mrf.mxu0
    %v305 = vadd.f32 %v241, %v304
    %306 = vdwg.mxu0
    %307 = vmatpush.msra.mxu0 0.0
    %308 = vmatpush.msra.mxu0 0.0
    %309 = vmatpush.msra.mxu0 0.0
    %310 = vmatpush.msra.mxu0 0.0
    %311 = vmatpush.msra.mxu0 0.0
    %312 = vmatpush.msra.mxu0 0.0
    %313 = vmatpush.msra.mxu0 0.0
    %314 = vmatpush.msra.mxu0 %v235
    %315 = vmatpush.msra.mxu0 %v214
    %316 = vmatpush.msra.mxu0 %v193
    %317 = vmatpush.msra.mxu0 %v172
    %318 = vmatpush.msra.mxu0 %v57
    %319 = vmatpush.msra.mxu0 %v151
    %320 = vmatpush.msra.mxu0 %v130
    %321 = vmatpush.msra.mxu0 %v109
    %322 = vmatpush.msra.mxu0 %v88
    %323 = vmatmul.f32.gmra.mxu0 %v245
    %v324 = vpop.f32.mrf.mxu0
    %v325 = vadd.f32 %v241, %v324
    %326 = vdwg.mxu0
    %v327 = vmax.f32 %v265, 0.0
    %v328 = vmax.f32 %v285, 0.0
    %v329 = vmax.f32 %v305, 0.0
    %v330 = vmax.f32 %v325, 0.0
    %331 = vrot.lane.b32.xlu0 %v327, 17
    %v332 = vpop.permute.xlu0 %331
    %333 = vrot.lane.b32.xlu0 %v328, 17
    %v334 = vpop.permute.xlu0 %333
    %335 = vrot.lane.b32.xlu0 %v329, 17
    %v336 = vpop.permute.xlu0 %335
    %337 = vrot.lane.b32.xlu0 %v330, 17
    %v338 = vpop.permute.xlu0 %337
    %v339 = vsel %vm76, %v336, %v338
    %v340 = vsel %vm76, %v334, %v336
    %v341 = vsel %vm76, %v332, %v334
    %v342 = vsel %vm76, %v338, %v332
    %v343 = vmul.f32 %v342, %v81
    %v344 = vmul.f32 %v341, %v82
    %v345 = vmul.f32 %v340, %v83
    %v346 = vmul.f32 %v339, %v84
    %347 = vrot.lane.b32.xlu0 %v327, 16
    %v348 = vpop.permute.xlu0 %347
    %349 = vrot.lane.b32.xlu0 %v328, 16
    %v350 = vpop.permute.xlu0 %349
    %351 = vrot.lane.b32.xlu0 %v329, 16
    %v352 = vpop.permute.xlu0 %351
    %353 = vrot.lane.b32.xlu0 %v330, 16
    %v354 = vpop.permute.xlu0 %353
    %v355 = vsel %vm97, %v352, %v354
    %v356 = vsel %vm97, %v350, %v352
    %v357 = vsel %vm97, %v348, %v350
    %v358 = vsel %vm97, %v354, %v348
    %v359 = vmul.f32 %v358, %v102
    %v360 = vmul.f32 %v357, %v103
    %v361 = vmul.f32 %v356, %v104
    %v362 = vmul.f32 %v355, %v105
    %363 = vrot.lane.b32.xlu0 %v327, 15
    %v364 = vpop.permute.xlu0 %363
    %365 = vrot.lane.b32.xlu0 %v328, 15
    %v366 = vpop.permute.xlu0 %365
    %367 = vrot.lane.b32.xlu0 %v329, 15
    %v368 = vpop.permute.xlu0 %367
    %369 = vrot.lane.b32.xlu0 %v330, 15
    %v370 = vpop.permute.xlu0 %369
    %v371 = vsel %vm118, %v368, %v370
    %v372 = vsel %vm118, %v366, %v368
    %v373 = vsel %vm118, %v364, %v366
    %v374 = vsel %vm118, %v370, %v364
    %v375 = vmul.f32 %v374, %v123
    %v376 = vmul.f32 %v373, %v124
    %v377 = vmul.f32 %v372, %v125
    %v378 = vmul.f32 %v371, %v126
    %379 = vrot.lane.b32.xlu0 %v327, 1
    %v380 = vpop.permute.xlu0 %379
    %381 = vrot.lane.b32.xlu0 %v328, 1
    %v382 = vpop.permute.xlu0 %381
    %383 = vrot.lane.b32.xlu0 %v329, 1
    %v384 = vpop.permute.xlu0 %383
    %385 = vrot.lane.b32.xlu0 %v330, 1
    %v386 = vpop.permute.xlu0 %385
    %v387 = vsel %vm139, %v384, %v386
    %v388 = vsel %vm139, %v382, %v384
    %v389 = vsel %vm139, %v380, %v382
    %v390 = vsel %vm139, %v386, %v380
    %v391 = vmul.f32 %v390, %v144
    %v392 = vmul.f32 %v389, %v145
    %v393 = vmul.f32 %v388, %v146
    %v394 = vmul.f32 %v387, %v147
    %395 = vrot.lane.b32.xlu0 %v327, 127
    %v396 = vpop.permute.xlu0 %395
    %397 = vrot.lane.b32.xlu0 %v328, 127
    %v398 = vpop.permute.xlu0 %397
    %399 = vrot.lane.b32.xlu0 %v329, 127
    %v400 = vpop.permute.xlu0 %399
    %401 = vrot.lane.b32.xlu0 %v330, 127
    %v402 = vpop.permute.xlu0 %401
    %v403 = vsel %vm160, %v400, %v402
    %v404 = vsel %vm160, %v398, %v400
    %v405 = vsel %vm160, %v396, %v398
    %v406 = vsel %vm160, %v402, %v396
    %v407 = vmul.f32 %v405, %v165
    %v408 = vmul.f32 %v404, %v166
    %v409 = vmul.f32 %v403, %v167
    %v410 = vmul.f32 %v406, %v168
    %411 = vrot.lane.b32.xlu0 %v327, 113
    %v412 = vpop.permute.xlu0 %411
    %413 = vrot.lane.b32.xlu0 %v328, 113
    %v414 = vpop.permute.xlu0 %413
    %415 = vrot.lane.b32.xlu0 %v329, 113
    %v416 = vpop.permute.xlu0 %415
    %417 = vrot.lane.b32.xlu0 %v330, 113
    %v418 = vpop.permute.xlu0 %417
    %v419 = vsel %vm181, %v416, %v418
    %v420 = vsel %vm181, %v414, %v416
    %v421 = vsel %vm181, %v412, %v414
    %v422 = vsel %vm181, %v418, %v412
    %v423 = vmul.f32 %v421, %v186
    %v424 = vmul.f32 %v420, %v187
    %v425 = vmul.f32 %v419, %v188
    %v426 = vmul.f32 %v422, %v189
    %427 = vrot.lane.b32.xlu0 %v327, 112
    %v428 = vpop.permute.xlu0 %427
    %429 = vrot.lane.b32.xlu0 %v328, 112
    %v430 = vpop.permute.xlu0 %429
    %431 = vrot.lane.b32.xlu0 %v329, 112
    %v432 = vpop.permute.xlu0 %431
    %433 = vrot.lane.b32.xlu0 %v330, 112
    %v434 = vpop.permute.xlu0 %433
    %v435 = vsel %vm202, %v432, %v434
    %v436 = vsel %vm202, %v430, %v432
    %v437 = vsel %vm202, %v428, %v430
    %v438 = vsel %vm202, %v434, %v428
    %v439 = vmul.f32 %v437, %v207
    %v440 = vmul.f32 %v436, %v208
    %v441 = vmul.f32 %v435, %v209
    %v442 = vmul.f32 %v438, %v210
    %443 = vrot.lane.b32.xlu0 %v327, 111
    %v444 = vpop.permute.xlu0 %443
    %445 = vrot.lane.b32.xlu0 %v328, 111
    %v446 = vpop.permute.xlu0 %445
    %447 = vrot.lane.b32.xlu0 %v329, 111
    %v448 = vpop.permute.xlu0 %447
    %449 = vrot.lane.b32.xlu0 %v330, 111
    %v450 = vpop.permute.xlu0 %449
    %v451 = vsel %vm223, %v448, %v450
    %v452 = vsel %vm223, %v446, %v448
    %v453 = vsel %vm223, %v444, %v446
    %v454 = vsel %vm223, %v450, %v444
    %v455 = vmul.f32 %v453, %v228
    %v456 = vmul.f32 %v452, %v229
    %v457 = vmul.f32 %v451, %v230
    %v458 = vmul.f32 %v454, %v231
    %v459 = vld [vmem:[%s3] sm:$0xff]
    %v461 = vsel %vm243, %v459, 0
    %463 = vmatpush.msra.mxu0 0.0
    %464 = vmatpush.msra.mxu0 0.0
    %465 = vmatpush.msra.mxu0 0.0
    %466 = vmatpush.msra.mxu0 0.0
    %467 = vmatpush.msra.mxu0 0.0
    %468 = vmatpush.msra.mxu0 0.0
    %469 = vmatpush.msra.mxu0 0.0
    %470 = vmatpush.msra.mxu0 %v455
    %471 = vmatpush.msra.mxu0 %v439
    %472 = vmatpush.msra.mxu0 %v423
    %473 = vmatpush.msra.mxu0 %v407
    %474 = vmatpush.msra.mxu0 %v327
    %475 = vmatpush.msra.mxu0 %v391
    %476 = vmatpush.msra.mxu0 %v375
    %477 = vmatpush.msra.mxu0 %v359
    %478 = vmatpush.msra.mxu0 %v343
    %479 = vmatmul.f32.gmra.mxu0 %v461
    %v480 = vpop.f32.mrf.mxu0
    %v481 = vadd.f32 0.0, %v480
    %482 = vdwg.mxu0
    %483 = vmatpush.msra.mxu0 0.0
    %484 = vmatpush.msra.mxu0 0.0
    %485 = vmatpush.msra.mxu0 0.0
    %486 = vmatpush.msra.mxu0 0.0
    %487 = vmatpush.msra.mxu0 0.0
    %488 = vmatpush.msra.mxu0 0.0
    %489 = vmatpush.msra.mxu0 0.0
    %490 = vmatpush.msra.mxu0 %v456
    %491 = vmatpush.msra.mxu0 %v440
    %492 = vmatpush.msra.mxu0 %v424
    %493 = vmatpush.msra.mxu0 %v408
    %494 = vmatpush.msra.mxu0 %v328
    %495 = vmatpush.msra.mxu0 %v392
    %496 = vmatpush.msra.mxu0 %v376
    %497 = vmatpush.msra.mxu0 %v360
    %498 = vmatpush.msra.mxu0 %v344
    %499 = vmatmul.f32.gmra.mxu0 %v461
    %v500 = vpop.f32.mrf.mxu0
    %v501 = vadd.f32 0.0, %v500
    %502 = vdwg.mxu0
    %503 = vmatpush.msra.mxu0 0.0
    %504 = vmatpush.msra.mxu0 0.0
    %505 = vmatpush.msra.mxu0 0.0
    %506 = vmatpush.msra.mxu0 0.0
    %507 = vmatpush.msra.mxu0 0.0
    %508 = vmatpush.msra.mxu0 0.0
    %509 = vmatpush.msra.mxu0 0.0
    %510 = vmatpush.msra.mxu0 %v457
    %511 = vmatpush.msra.mxu0 %v441
    %512 = vmatpush.msra.mxu0 %v425
    %513 = vmatpush.msra.mxu0 %v409
    %514 = vmatpush.msra.mxu0 %v329
    %515 = vmatpush.msra.mxu0 %v393
    %516 = vmatpush.msra.mxu0 %v377
    %517 = vmatpush.msra.mxu0 %v361
    %518 = vmatpush.msra.mxu0 %v345
    %519 = vmatmul.f32.gmra.mxu0 %v461
    %v520 = vpop.f32.mrf.mxu0
    %v521 = vadd.f32 0.0, %v520
    %522 = vdwg.mxu0
    %523 = vmatpush.msra.mxu0 0.0
    %524 = vmatpush.msra.mxu0 0.0
    %525 = vmatpush.msra.mxu0 0.0
    %526 = vmatpush.msra.mxu0 0.0
    %527 = vmatpush.msra.mxu0 0.0
    %528 = vmatpush.msra.mxu0 0.0
    %529 = vmatpush.msra.mxu0 0.0
    %530 = vmatpush.msra.mxu0 %v458
    %531 = vmatpush.msra.mxu0 %v442
    %532 = vmatpush.msra.mxu0 %v426
    %533 = vmatpush.msra.mxu0 %v410
    %534 = vmatpush.msra.mxu0 %v330
    %535 = vmatpush.msra.mxu0 %v394
    %536 = vmatpush.msra.mxu0 %v378
    %537 = vmatpush.msra.mxu0 %v362
    %538 = vmatpush.msra.mxu0 %v346
    %539 = vmatmul.f32.gmra.mxu0 %v461
    %v540 = vpop.f32.mrf.mxu0
    %v541 = vadd.f32 0.0, %v540
    %542 = vdwg.mxu0
    %v543 = vld [vmem:[%s4] sm:$0xff]
    %545 = vset.pattern.permute.xlu0 0
    %546 = vperm.xlu0 %545, %v543
    %v547 = vpop.permute.xlu0 %546
    %v549 = vadd.f32 %v54, %v547
    %v550 = vadd.f32 %v55, %v547
    %v551 = vadd.f32 %v56, %v547
    %v552 = vadd.f32 %v57, %v547
    %v553 = vadd.f32 %v549, %v481
    %v554 = vadd.f32 %v550, %v501
    %v555 = vadd.f32 %v551, %v521
    %v556 = vadd.f32 %v552, %v541
    %v557 = vmax.f32 %v553, 0.0
    %v558 = vmax.f32 %v554, 0.0
    %v559 = vmax.f32 %v555, 0.0
    %v560 = vmax.f32 %v556, 0.0
    %561 = vst [vmem:[#allocation7] sm:$0xff] %v557
    %562 = vst [vmem:[#allocation7 + $0x8] sm:$0xff] %v558
    %563 = vst [vmem:[#allocation7 + $0x10] sm:$0xff] %v559
    %564 = vst [vmem:[#allocation7 + $0x18] sm:$0xff] %v560
    // Predicated region
    $region34: #{tpu_custom_call.1} parent=1 // pred_check
      _
    $region35: #{tpu_custom_call.1} parent=1 // pred_check_branch
      %566 = sbr.rel (0) target = $region37
    $region36: #{tpu_custom_call.1} parent=1 // pred_region
      %568 = vsyncadd [#allocation4], 0
      %s570 = sshll.u32 [#allocation7], 4
      %s571 = int_to_ptr.vmem [resolvable:$true] %s570
      %s572 = sshll.u32 %s6, 4
      %s573 = int_to_ptr.hbm [resolvable:$true] %s572
      %575 = dma.vmem_to_hbm [thread:$0]  %s571, 512, %s573, [#allocation4]
    $region37: #{tpu_custom_call.1} parent=1 // pred_fallthru
      _
    // Predicated region
    $region38: #{tpu_custom_call.1} parent=1 // pred_check
      _
    $region39: #{tpu_custom_call.1} parent=1 // pred_check_branch
      %577 = sbr.rel (0) target = $region41
    $region40: #{tpu_custom_call.1} parent=1 // pred_region
      %579 = dma.done [#allocation4], 512
    $region41: #{tpu_custom_call.1} parent=1 // pred_fallthru
      _
    %580 = vsyncpa [#allocation3], 1
    %581 = vsyncpa [#allocation6], 1
    %582 = vsyncpa [#allocation4], 1

</llo_original>
